<compile_context>
chip_gen: v5e
topology: v5e:2x2
jax: 0.10.0
libtpu: 0.0.40
codegen_flags: <defaults>
</compile_context>

<pallas_src>
import functools

import jax
import jax.numpy as jnp
from jax.experimental import pallas as pl
from jax.experimental.pallas import tpu as pltpu


# ------------------------- helpers (layout plumbing) -------------------------
def _round_up(v, m):
    return ((v + m - 1) // m) * m


def _pad2d(x, rows, cols):
    r, c = x.shape
    return jnp.pad(x, ((0, rows - r), (0, cols - c)))


def _pick_tile(dim, candidates):
    for c in candidates:
        if dim >= c and dim % c == 0:
            return c
    return dim  # dims are pre-padded to multiples of 128, so this is a fallback


_VMEM_LIMIT = 48 * 1024 * 1024  # fits v7x's 64 MiB physical VMEM per TC
_TM_CANDIDATES = (512, 256, 128)
_TK_CANDIDATES = (512, 256, 128)


# ------------------------- kernel 1 / 3: fused matmul (+bias, +relu) ---------
def _matmul_kernel(a_ref, b_ref, *rest, apply_relu, has_bias):
    if has_bias:
        bias_ref, o_ref, acc_ref = rest
    else:
        o_ref, acc_ref = rest

    k = pl.program_id(1)

    @pl.when(k == 0)
    def _():
        acc_ref[...] = jnp.zeros_like(acc_ref)

    # cast rhs to lhs dtype (no-op when both bf16; keeps one MXU input dtype)
    acc_ref[...] += jnp.dot(a_ref[...], b_ref[...].astype(a_ref.dtype),
                            preferred_element_type=jnp.float32)

    @pl.when(k == pl.num_programs(1) - 1)
    def _():
        acc = acc_ref[...]
        if has_bias:
            acc = acc + bias_ref[...]
        if apply_relu:
            acc = jnp.maximum(acc, 0.0)
        o_ref[...] = acc.astype(o_ref.dtype)


def fused_matmul(a, b, bias=None, *, apply_relu=False, out_dtype=jnp.float32,
                 tm=None, tk=None):
    """act(a @ b [+ bias]) tiled over rows of `a` and the contraction dim."""
    M, K = a.shape
    Kb, N = b.shape
    assert K == Kb
    tm = tm or _pick_tile(M, _TM_CANDIDATES)
    tk = tk or _pick_tile(K, _TK_CANDIDATES)
    has_bias = bias is not None

    in_specs = [
        pl.BlockSpec((tm, tk), lambda i, k: (i, k)),   # row/K tile of a
        pl.BlockSpec((tk, N), lambda i, k: (k, 0)),    # K tile of b (lane-dense N)
    ]
    operands = [a, b]
    if has_bias:
        in_specs.append(pl.BlockSpec((1, N), lambda i, k: (0, 0)))
        operands.append(bias)

    kernel = functools.partial(_matmul_kernel, apply_relu=apply_relu,
                               has_bias=has_bias)
    return pl.pallas_call(
        kernel,
        out_shape=jax.ShapeDtypeStruct((M, N), out_dtype),
        grid_spec=pltpu.PrefetchScalarGridSpec(
            num_scalar_prefetch=0,
            grid=(M // tm, K // tk),
            in_specs=in_specs,
            out_specs=pl.BlockSpec((tm, N), lambda i, k: (i, 0)),
            scratch_shapes=[pltpu.VMEM((tm, N), jnp.float32)],
        ),
        compiler_params=pltpu.CompilerParams(
            dimension_semantics=("parallel", "arbitrary"),
            vmem_limit_bytes=_VMEM_LIMIT),
    )(*operands)


# ------------------------- kernel 2: relu(A @ XW1 + b1) @ W2 -----------------
def _gcn_layer_project_kernel(a_ref, xw1_ref, b1_ref, w2_ref, o_ref, acc_ref):
    k = pl.program_id(1)

    @pl.when(k == 0)
    def _():
        acc_ref[...] = jnp.zeros_like(acc_ref)

    acc_ref[...] += jnp.dot(a_ref[...], xw1_ref[...].astype(a_ref.dtype),
                            preferred_element_type=jnp.float32)

    @pl.when(k == pl.num_programs(1) - 1)
    def _():
        h = jnp.maximum(acc_ref[...] + b1_ref[...], 0.0)          # H1 (stays in VMEM)
        o_ref[...] = jnp.dot(h, w2_ref[...],
                             preferred_element_type=jnp.float32).astype(o_ref.dtype)


def gcn_layer_project(a, xw1, b1, w2, *, out_dtype=jnp.float32, tm=None, tk=None):
    M, K = a.shape
    Kx, H = xw1.shape
    Hw, C = w2.shape
    assert K == Kx and H == Hw and b1.shape == (1, H)
    tm = tm or _pick_tile(M, _TM_CANDIDATES)
    tk = tk or _pick_tile(K, _TK_CANDIDATES)

    return pl.pallas_call(
        _gcn_layer_project_kernel,
        out_shape=jax.ShapeDtypeStruct((M, C), out_dtype),
        grid_spec=pltpu.PrefetchScalarGridSpec(
            num_scalar_prefetch=0,
            grid=(M // tm, K // tk),
            in_specs=[
                pl.BlockSpec((tm, tk), lambda i, k: (i, k)),   # A_hat row/K tile
                pl.BlockSpec((tk, H), lambda i, k: (k, 0)),    # XW1 K tile
                pl.BlockSpec((1, H), lambda i, k: (0, 0)),     # b1 (resident)
                pl.BlockSpec((H, C), lambda i, k: (0, 0)),     # W2 (resident)
            ],
            out_specs=pl.BlockSpec((tm, C), lambda i, k: (i, 0)),
            scratch_shapes=[pltpu.VMEM((tm, H), jnp.float32)],
        ),
        compiler_params=pltpu.CompilerParams(
            dimension_semantics=("parallel", "arbitrary"),
            vmem_limit_bytes=_VMEM_LIMIT),
    )(a, xw1, b1, w2)


# ------------------------- ServingModel.forward ------------------------------
def serving_model_forward(a_hat, features, params):
    """ServingModel.forward(features) -> GCN(graph, features) logits [N, C]."""
    w1, b1, w2, b2 = params["w1"], params["b1"], params["w2"], params["b2"]
    N, F = features.shape
    H, C = w1.shape[1], w2.shape[1]

    # Layout plumbing: pad node count to the row-tile multiple and pad all
    # output/lane dims to multiples of 128 (lane-dense, unmasked stores).
    Np = _round_up(N, 128)
    Fp = _round_up(F, 128)
    Hp = _round_up(H, 128)
    Cp = _round_up(C, 128)

    a_p = _pad2d(a_hat, Np, Np).astype(jnp.bfloat16)      # bandwidth-dominant operand
    x_p = _pad2d(features, Np, Fp).astype(jnp.float32)
    w1_p = _pad2d(w1, Fp, Hp)
    b1_p = _pad2d(b1, 1, Hp)
    w2_p = _pad2d(w2, Hp, Cp)
    b2_p = _pad2d(b2, 1, Cp)

    # bf16 intermediates: halves the HBM round-trip of the [Np, Hp]/[Np, Cp]
    # tensors and keeps both A_hat matmuls on the bf16 MXU path (f32 acc).
    xw1 = fused_matmul(x_p, w1_p, out_dtype=jnp.bfloat16)           # [Np, Hp]
    hw2 = gcn_layer_project(a_p, xw1, b1_p, w2_p,
                            out_dtype=jnp.bfloat16)                 # [Np, Cp]
    logits_p = fused_matmul(a_p, hw2, b2_p, out_dtype=jnp.float32)  # [Np, Cp]

    return logits_p[:N, :C]


# ------------------------- deterministic setup (glue) -------------------------
def make_normalized_adjacency(key, n_nodes, n_edges):
    """Small random undirected graph, symmetrically normalized with self loops."""
    k1, k2 = jax.random.split(key)
    src = jax.random.randint(k1, (n_edges,), 0, n_nodes)
    dst = jax.random.randint(k2, (n_edges,), 0, n_nodes)
    adj = jnp.zeros((n_nodes, n_nodes), jnp.float32)
    adj = adj.at[src, dst].set(1.0)
    adj = jnp.maximum(adj, adj.T)                     # undirected
    adj = adj + jnp.eye(n_nodes, dtype=jnp.float32)   # self loops
    deg = jnp.sum(adj, axis=1)
    d_inv_sqrt = 1.0 / jnp.sqrt(deg)
    return adj * d_inv_sqrt[:, None] * d_inv_sqrt[None, :]


def init_params(key, in_dim, hidden_dim, num_classes):
    k1, k2 = jax.random.split(key)
    return {
        "w1": jax.random.normal(k1, (in_dim, hidden_dim), jnp.float32) * 0.1,
        "b1": jnp.zeros((1, hidden_dim), jnp.float32),
        "w2": jax.random.normal(k2, (hidden_dim, num_classes), jnp.float32) * 0.1,
        "b2": jnp.zeros((1, num_classes), jnp.float32),
    }


if __name__ == "__main__":
    # Small but non-aligned shapes (exercise padding + multi-step grid).
    N_NODES, IN_DIM, HIDDEN, NUM_CLASSES = 300, 100, 48, 10

    root = jax.random.PRNGKey(0)
    k_graph, k_feat, k_param = jax.random.split(root, 3)

    a_hat = make_normalized_adjacency(k_graph, N_NODES, n_edges=900)
    features = jax.random.normal(k_feat, (N_NODES, IN_DIM), jnp.float32)
    params = init_params(k_param, IN_DIM, HIDDEN, NUM_CLASSES)

    logits = serving_model_forward(a_hat, features, params)
    jax.block_until_ready(logits)

    # sanity check against a pure-JAX f32 reference of the same forward
    ref = a_hat @ (jnp.maximum(a_hat @ (features @ params["w1"]) + params["b1"], 0.0)
                   @ params["w2"]) + params["b2"]
    assert logits.shape == (N_NODES, NUM_CLASSES)
    # bf16 A_hat + bf16 intermediates on the Pallas path -> looser tolerance
    assert jnp.allclose(logits, ref, atol=3e-2, rtol=3e-2)

    print("KERNEL_OK")
</pallas_src>

<mosaic_0001>
module attributes {stable_mosaic.version = 11 : i64} {
  func.func @_matmul_kernel(%arg0: i32, %arg1: i32, %arg2: memref<128x128xf32, #tpu.memory_space<vmem>>, %arg3: memref<128x128xf32, #tpu.memory_space<vmem>>, %arg4: memref<128x128xbf16, #tpu.memory_space<vmem>>, %arg5: memref<128x128xf32, #tpu.memory_space<vmem>>) attributes {dimension_semantics = [#tpu.dimension_semantics<parallel>, #tpu.dimension_semantics<arbitrary>], iteration_bounds = array<i64: 3, 1>, scalar_prefetch = 0 : i64, scratch_operands = 1 : i64, tpu.core_type = #tpu.core_type<tc>, window_params = [{transform_indices = @transform_0, window_bounds = array<i64: 128, 128>}, {transform_indices = @transform_1, window_bounds = array<i64: 128, 128>}, {transform_indices = @transform_2, window_bounds = array<i64: 128, 128>}]} {
    %c0_i32 = arith.constant 0 : i32
    %0 = arith.cmpi eq, %arg1, %c0_i32 : i32
    %1 = arith.extui %0 : i1 to i32
    %c0_i32_0 = arith.constant 0 : i32
    %2 = arith.cmpi ne, %1, %c0_i32_0 : i32
    scf.if %2 {
      %cst_10 = arith.constant 0.000000e+00 : f32
      %12 = vector.broadcast %cst_10 : f32 to vector<128x128xf32>
      %c0_11 = arith.constant 0 : index
      %c0_12 = arith.constant 0 : index
      %13 = vector.load %arg5[%c0_11, %c0_12] : memref<128x128xf32, #tpu.memory_space<vmem>>, vector<128x128xf32>
      tpu.vector_store %arg5[%c0_11, %c0_12], %12 {strides = array<i32>} : memref<128x128xf32, #tpu.memory_space<vmem>>, vector<128x128xf32>,
    } else {
    }
    %c0 = arith.constant 0 : index
    %c0_1 = arith.constant 0 : index
    %3 = vector.load %arg5[%c0, %c0_1] : memref<128x128xf32, #tpu.memory_space<vmem>>, vector<128x128xf32>
    %c0_2 = arith.constant 0 : index
    %c0_3 = arith.constant 0 : index
    %4 = vector.load %arg2[%c0_2, %c0_3] : memref<128x128xf32, #tpu.memory_space<vmem>>, vector<128x128xf32>
    %c0_4 = arith.constant 0 : index
    %c0_5 = arith.constant 0 : index
    %5 = vector.load %arg3[%c0_4, %c0_5] : memref<128x128xf32, #tpu.memory_space<vmem>>, vector<128x128xf32>
    %cst = arith.constant dense<0.000000e+00> : vector<128x128xf32>
    %6 = tpu.matmul %4, %5, %cst {dimension_numbers = #tpu.dot_dimension_numbers<[1], [0], [0], [1], [0, 0, 1, 1], [], []>} : vector<128x128xf32>, vector<128x128xf32>, vector<128x128xf32> -> vector<128x128xf32>
    %7 = arith.addf %3, %6 : vector<128x128xf32>
    %c0_6 = arith.constant 0 : index
    %c0_7 = arith.constant 0 : index
    %8 = vector.load %arg5[%c0_6, %c0_7] : memref<128x128xf32, #tpu.memory_space<vmem>>, vector<128x128xf32>
    tpu.vector_store %arg5[%c0_6, %c0_7], %7 {strides = array<i32>} : memref<128x128xf32, #tpu.memory_space<vmem>>, vector<128x128xf32>,
    %c0_i32_8 = arith.constant 0 : i32
    %9 = arith.cmpi eq, %arg1, %c0_i32_8 : i32
    %10 = arith.extui %9 : i1 to i32
    %c0_i32_9 = arith.constant 0 : i32
    %11 = arith.cmpi ne, %10, %c0_i32_9 : i32
    scf.if %11 {
      %c0_10 = arith.constant 0 : index
      %c0_11 = arith.constant 0 : index
      %12 = vector.load %arg5[%c0_10, %c0_11] : memref<128x128xf32, #tpu.memory_space<vmem>>, vector<128x128xf32>
      %13 = arith.truncf %12 : vector<128x128xf32> to vector<128x128xbf16>
      %c0_12 = arith.constant 0 : index
      %c0_13 = arith.constant 0 : index
      %14 = vector.load %arg4[%c0_12, %c0_13] : memref<128x128xbf16, #tpu.memory_space<vmem>>, vector<128x128xbf16>
      tpu.vector_store %arg4[%c0_12, %c0_13], %13 {strides = array<i32>} : memref<128x128xbf16, #tpu.memory_space<vmem>>, vector<128x128xbf16>,
    } else {
    }
    return
  }
  func.func @transform_0(%arg0: i32, %arg1: i32) -> (i32, i32) {
    %c0_i32 = arith.constant 0 : i32
    return %arg0, %arg1 : i32, i32
  }
  func.func @transform_1(%arg0: i32, %arg1: i32) -> (i32, i32) {
    %c0_i32 = arith.constant 0 : i32
    %c0_i32_0 = arith.constant 0 : i32
    return %arg1, %c0_i32 : i32, i32
  }
  func.func @transform_2(%arg0: i32, %arg1: i32) -> (i32, i32) {
    %c0_i32 = arith.constant 0 : i32
    %c0_i32_0 = arith.constant 0 : i32
    return %arg0, %c0_i32 : i32, i32
  }
}

</mosaic_0001>

<llo_original>
// kernel: tpu_custom_call.1
$region0: #{tpu_custom_call.1}
  #allocation0 [shape = 'u32[]', space=smem, size = 0x4, offset = 0x4, fixed_abs, tag = 'smem constant byte address 0x4 - core index']
  #allocation1 [shape = 'u32[72,128]{1,0:T(1,128)}', space=vmem, size = 0x9000, scoped, tag = 'internal scratch']
  #allocation2 [shape = 'f32[128,128]{1,0:T(8,128)}', space=vmem, size = 0x10000, scoped, tag = 'scratch operand']
  %s0 = inlined_call_operand.hbm [shape: f32[384,128], index: 0, kind: input, shape index: {}]
  %s1 = inlined_call_operand.hbm [shape: f32[128,128], index: 1, kind: input, shape index: {}]
  %s2 = inlined_call_operand.hbm [shape: bf16[384,128], index: 2, kind: output, shape index: {}]
  %s3 = sld [smem:[#allocation0]]
  $region57: #{tpu_custom_call.1} parent=0
    _
  %s5 = ssub.s32 1, %s3
  %s6 = scalar_select 0, %s5, %s3
  $region1: #{tpu_custom_call.1} parent=0
    #allocation3 [shape = 'u8[131072]{0}', space=vmem, size = 0x20000, scoped, tag = 'input window, operand 0']
    #allocation4 [shape = 's32[2]{0}', space=sflag, size = 0x8, scoped, tag = 'scoped memory for tpu_custom_call.1']
    #allocation5 [shape = 's32[2]{0}', space=sflag, size = 0x8, scoped, tag = 'scoped memory for tpu_custom_call.1']
    #allocation6 [shape = 'u8[65536]{0}', space=vmem, size = 0x10000, scoped, tag = 'input window, operand 1, single buffered']
    #allocation7 [shape = 's32[1]{0}', space=sflag, size = 0x4, scoped, tag = 'scoped memory for tpu_custom_call.1']
    #allocation8 [shape = 'u8[65536]{0}', space=vmem, size = 0x10000, scoped, tag = 'output window, operand 0']
    %7 = vsyncpa [#allocation4], 0
    %s8 = scalar_lea.sflag [#allocation4], 1
    %9 = vsyncpa %s8, 0
    %10 = vsyncpa [#allocation7], 0
    %11 = vsyncpa [#allocation5], 0
    %s12 = scalar_lea.sflag [#allocation5], 1
    %13 = vsyncpa %s12, 0
    loop: start=0, step=1, limit=5
    $region2: #{tpu_custom_call.1} parent=1 // loop_pre_header
      _
    $region3: #{tpu_custom_call.1} parent=1 // loop_header
      %s15 = sphi 0, %s19
      %p16 = scmp.ge.s32.totalorder %s15, 5
      %s22 = sphi 0, %s34
      %s23 = sphi 0, %s30
      %s24 = sphi 0, %s22
      %s25 = sphi 0, %s23
      %s26 = sphi 0, %s24
      %s27 = sphi 0, %s25
      %s39 = sphi 0, %s41
      %s42 = sphi 0, %s39
      %s43 = sphi 0, %s42
      %s59 = sphi 0, %s43
      %s65 = sphi 0, %s67
      %s68 = sphi 0, %s65
      %s69 = sphi 0, %s68
      %s85 = sphi 0, %s69
      %s91 = sphi 0, %s93
      %s94 = sphi 0, %s91
      %s95 = sphi 0, %s94
      %s111 = sphi 0, %s95
    $region4: #{tpu_custom_call.1} parent=1 // loop_header_branch
      %18 = sbr.rel (%p16) target = $region8
    $region5: #{tpu_custom_call.1} parent=1 // loop_body
      %s20 = ssub.s32 %s15, 1
      %s21 = ssub.s32 %s15, 2
      %s28 = sadd.s32 1, %s23
      %p29 = scmp.ge.s32.totalorder %s28, 1
      %s30 = scalar_select %p29, 0, %s28
      %s31 = sadd.s32 1, %s22
      %s32 = scalar_select %p29, %s31, %s22
      %p33 = scmp.ge.s32.totalorder %s32, 3
      %s34 = scalar_select %p33, 0, %s32
      %s35 = ssub.s32 %s22, %s34
      %s36 = ssub.s32 %s23, %s30
      %s37 = sor.u32 %s35, %s36
      %p38 = scmp.eq.s32.totalorder %s37, 0
      %s40 = sadd.s32 %s39, 1
      %s41 = scalar_select %p38, %s39, %s40
      %p44 = pneg %p38
      %p45 = scmp.eq.s32.totalorder %s15, 2
      %p46 = por %p44, %p45
      %p47 = scmp.ne.s32.totalorder %s39, %s42
      %p48 = scmp.eq.s32.totalorder %s15, 0
      %p49 = por %p47, %p48
      %p50 = scmp.ne.s32.totalorder %s39, %s42
      %p51 = scmp.eq.s32.totalorder %s20, 2
      %p52 = por %p50, %p51
      %p53 = scmp.ne.s32.totalorder %s42, %s43
      %p54 = scmp.eq.s32.totalorder %s20, 0
      %p55 = por %p53, %p54
      %p56 = scmp.ne.s32.totalorder %s42, %s43
      %p57 = scmp.eq.s32.totalorder %s21, 2
      %p58 = por %p56, %p57
      %p60 = scmp.ne.s32.totalorder %s43, %s59
      %p61 = scmp.eq.s32.totalorder %s21, 0
      %p62 = por %p60, %p61
      %s63 = ssub.s32 %s23, %s30
      %p64 = scmp.eq.s32.totalorder %s63, 0
      %s66 = sadd.s32 %s65, 1
      %s67 = scalar_select %p64, %s65, %s66
      %p70 = pneg %p64
      %p71 = scmp.eq.s32.totalorder %s15, 2
      %p72 = por %p70, %p71
      %p73 = scmp.ne.s32.totalorder %s65, %s68
      %p74 = scmp.eq.s32.totalorder %s15, 0
      %p75 = por %p73, %p74
      %p76 = scmp.ne.s32.totalorder %s65, %s68
      %p77 = scmp.eq.s32.totalorder %s20, 2
      %p78 = por %p76, %p77
      %p79 = scmp.ne.s32.totalorder %s68, %s69
      %p80 = scmp.eq.s32.totalorder %s20, 0
      %p81 = por %p79, %p80
      %p82 = scmp.ne.s32.totalorder %s68, %s69
      %p83 = scmp.eq.s32.totalorder %s21, 2
      %p84 = por %p82, %p83
      %p86 = scmp.ne.s32.totalorder %s69, %s85
      %p87 = scmp.eq.s32.totalorder %s21, 0
      %p88 = por %p86, %p87
      %s89 = ssub.s32 %s22, %s34
      %p90 = scmp.eq.s32.totalorder %s89, 0
      %s92 = sadd.s32 %s91, 1
      %s93 = scalar_select %p90, %s91, %s92
      %p96 = pneg %p90
      %p97 = scmp.eq.s32.totalorder %s15, 2
      %p98 = por %p96, %p97
      %p99 = scmp.ne.s32.totalorder %s91, %s94
      %p100 = scmp.eq.s32.totalorder %s15, 0
      %p101 = por %p99, %p100
      %p102 = scmp.ne.s32.totalorder %s91, %s94
      %p103 = scmp.eq.s32.totalorder %s20, 2
      %p104 = por %p102, %p103
      %p105 = scmp.ne.s32.totalorder %s94, %s95
      %p106 = scmp.eq.s32.totalorder %s20, 0
      %p107 = por %p105, %p106
      %p108 = scmp.ne.s32.totalorder %s94, %s95
      %p109 = scmp.eq.s32.totalorder %s21, 2
      %p110 = por %p108, %p109
      %p112 = scmp.ne.s32.totalorder %s95, %s111
      %p113 = scmp.eq.s32.totalorder %s21, 0
      %p114 = por %p112, %p113
      %p115 = scmp.le.s32.totalorder 1, %s15
      %p116 = scmp.lt.s32.totalorder %s15, 4
      %p117 = pnand %p115, %p116
      %p118 = pneg %p117
      // Predicated region
      $region9: #{tpu_custom_call.1} parent=5 // pred_check
        _
      $region10: #{tpu_custom_call.1} parent=5 // pred_check_branch
        %120 = sbr.rel (%p117) target = $region12
      $region11: #{tpu_custom_call.1} parent=5 // pred_region
        %s121 = ssub.s32 %s15, 1
        // Predicated region
        $region13: #{tpu_custom_call.1} parent=11 // pred_check
          %p122 = pneg %p81
        $region14: #{tpu_custom_call.1} parent=11 // pred_check_branch
          %124 = sbr.rel (%p122) target = $region16
        $region15: #{tpu_custom_call.1} parent=11 // pred_region
          %s125 = smul.u32 16, %s25
          %127 = vsyncadd [#allocation7], 0
          %s128 = smul.addr %s125, 8
          %s129 = scalar_lea.hbm %s1, %s128
          %s130 = sshll.u32 %s129, 4
          %s131 = int_to_ptr.hbm [resolvable:$true] %s130
          %s132 = sshll.u32 [#allocation6], 4
          %s133 = int_to_ptr.vmem [resolvable:$true] %s132
          %138 = dma.hbm_to_vmem [thread:$0]  %s131, 2048, %s133, [#allocation7], 128, 128, 8
        $region16: #{tpu_custom_call.1} parent=11 // pred_fallthru
          _
      $region12: #{tpu_custom_call.1} parent=5 // pred_fallthru
        _
      %p139 = scmp.lt.s32.totalorder %s15, 3
      // Predicated region
      $region17: #{tpu_custom_call.1} parent=5 // pred_check
        %p140 = pneg %p139
      $region18: #{tpu_custom_call.1} parent=5 // pred_check_branch
        %142 = sbr.rel (%p140) target = $region20
      $region19: #{tpu_custom_call.1} parent=5 // pred_region
        // Predicated region
        $region21: #{tpu_custom_call.1} parent=19 // pred_check
          %p143 = pneg %p49
        $region22: #{tpu_custom_call.1} parent=19 // pred_check_branch
          %145 = sbr.rel (%p143) target = $region24
        $region23: #{tpu_custom_call.1} parent=19 // pred_region
          %s146 = sand.u32 %s39, 1
          %s147 = scalar_lea.sflag [#allocation4], %s146
          %s148 = sand.u32 %s39, 1
          %s149 = smul.addr %s148, 128
          %s150 = scalar_lea.vmem [#allocation3], %s149
          %s151 = smul.u32 16, %s22
          %153 = vsyncadd %s147, 0
          %s154 = sadd.s32 %s23, %s151
          %s155 = smul.addr %s154, 8
          %s156 = scalar_lea.hbm %s0, %s155
          %s157 = sshll.u32 %s156, 4
          %s158 = int_to_ptr.hbm [resolvable:$true] %s157
          %s159 = sshll.u32 %s150, 4
          %s160 = int_to_ptr.vmem [resolvable:$true] %s159
          %165 = dma.hbm_to_vmem [thread:$0]  %s158, 2048, %s160, %s147, 128, 128, 8
        $region24: #{tpu_custom_call.1} parent=19 // pred_fallthru
          _
      $region20: #{tpu_custom_call.1} parent=5 // pred_fallthru
        _
      %p166 = scmp.le.s32.totalorder 1, %s15
      %p167 = scmp.lt.s32.totalorder %s15, 4
      %p168 = pnand %p166, %p167
      %p169 = pneg %p168
      // Predicated region
      $region25: #{tpu_custom_call.1} parent=5 // pred_check
        _
      $region26: #{tpu_custom_call.1} parent=5 // pred_check_branch
        %171 = sbr.rel (%p168) target = $region28
      $region27: #{tpu_custom_call.1} parent=5 // pred_region
        %s172 = ssub.s32 %s15, 1
        %s173 = sand.u32 %s42, 1
        %s174 = scalar_lea.sflag [#allocation4], %s173
        %s175 = sand.u32 %s42, 1
        %s176 = smul.addr %s175, 128
        %s177 = scalar_lea.vmem [#allocation3], %s176
        // Predicated region
        $region29: #{tpu_custom_call.1} parent=27 // pred_check
          %p178 = pneg %p55
        $region30: #{tpu_custom_call.1} parent=27 // pred_check_branch
          %180 = sbr.rel (%p178) target = $region32
        $region31: #{tpu_custom_call.1} parent=27 // pred_region
          %182 = dma.done %s174, 2048
        $region32: #{tpu_custom_call.1} parent=27 // pred_fallthru
          _
        // Predicated region
        $region33: #{tpu_custom_call.1} parent=27 // pred_check
          %p183 = pneg %p81
        $region34: #{tpu_custom_call.1} parent=27 // pred_check_branch
          %185 = sbr.rel (%p183) target = $region36
        $region35: #{tpu_custom_call.1} parent=27 // pred_region
          %187 = dma.done [#allocation7], 2048
        $region36: #{tpu_custom_call.1} parent=27 // pred_fallthru
          _
        %s188 = sand.u32 %s42, 1
        %s189 = scalar_lea.sflag [#allocation4], %s188
        %s190 = sand.u32 %s42, 1
        %s191 = smul.addr %s190, 128
        %s192 = scalar_lea.vmem [#allocation3], %s191
        %p193 = pneg %p55
        %p194 = pneg %p52
        %p195 = pneg %p81
        %p196 = pneg %p78
        %p197 = pneg %p107
        %p198 = pneg %p104
        %s199 = sand.u32 %s94, 1
        %s200 = scalar_lea.sflag [#allocation5], %s199
        %s201 = sand.u32 %s94, 1
        %s202 = smul.addr %s201, 64
        %s203 = scalar_lea.vmem [#allocation8], %s202
        %s204 = smul.u32 16, %s24
        %s205 = smul.u32 16, %s25
        %s206 = smul.u32 16, %s24
        %p207 = scmp.eq.s32.totalorder %s25, 0
        // Predicated region
        $region37: #{tpu_custom_call.1} parent=27 // pred_check
          %p208 = pneg %p207
        $region38: #{tpu_custom_call.1} parent=27 // pred_check_branch
          %210 = sbr.rel (%p208) target = $region40
        $region39: #{tpu_custom_call.1} parent=27 // pred_region
          %211 = vst [vmem:[#allocation2] sm:$0xff] 0.0
          %212 = vst [vmem:[#allocation2 + $0x8] sm:$0xff] 0.0
          %213 = vst [vmem:[#allocation2 + $0x10] sm:$0xff] 0.0
          %214 = vst [vmem:[#allocation2 + $0x18] sm:$0xff] 0.0
          %215 = vst [vmem:[#allocation2 + $0x20] sm:$0xff] 0.0
          %216 = vst [vmem:[#allocation2 + $0x28] sm:$0xff] 0.0
          %217 = vst [vmem:[#allocation2 + $0x30] sm:$0xff] 0.0
          %218 = vst [vmem:[#allocation2 + $0x38] sm:$0xff] 0.0
          %219 = vst [vmem:[#allocation2 + $0x40] sm:$0xff] 0.0
          %220 = vst [vmem:[#allocation2 + $0x48] sm:$0xff] 0.0
          %221 = vst [vmem:[#allocation2 + $0x50] sm:$0xff] 0.0
          %222 = vst [vmem:[#allocation2 + $0x58] sm:$0xff] 0.0
          %223 = vst [vmem:[#allocation2 + $0x60] sm:$0xff] 0.0
          %224 = vst [vmem:[#allocation2 + $0x68] sm:$0xff] 0.0
          %225 = vst [vmem:[#allocation2 + $0x70] sm:$0xff] 0.0
          %226 = vst [vmem:[#allocation2 + $0x78] sm:$0xff] 0.0
        $region40: #{tpu_custom_call.1} parent=27 // pred_fallthru
          _
        %v227 = vld [vmem:[#allocation2] sm:$0xff]
        %v228 = vld [vmem:[#allocation2 + $0x8] sm:$0xff]
        %v229 = vld [vmem:[#allocation2 + $0x10] sm:$0xff]
        %v230 = vld [vmem:[#allocation2 + $0x18] sm:$0xff]
        %v231 = vld [vmem:[#allocation2 + $0x20] sm:$0xff]
        %v232 = vld [vmem:[#allocation2 + $0x28] sm:$0xff]
        %v233 = vld [vmem:[#allocation2 + $0x30] sm:$0xff]
        %v234 = vld [vmem:[#allocation2 + $0x38] sm:$0xff]
        %v235 = vld [vmem:[#allocation2 + $0x40] sm:$0xff]
        %v236 = vld [vmem:[#allocation2 + $0x48] sm:$0xff]
        %v237 = vld [vmem:[#allocation2 + $0x50] sm:$0xff]
        %v238 = vld [vmem:[#allocation2 + $0x58] sm:$0xff]
        %v239 = vld [vmem:[#allocation2 + $0x60] sm:$0xff]
        %v240 = vld [vmem:[#allocation2 + $0x68] sm:$0xff]
        %v241 = vld [vmem:[#allocation2 + $0x70] sm:$0xff]
        %v242 = vld [vmem:[#allocation2 + $0x78] sm:$0xff]
        %v243 = vld [vmem:[%s177] sm:$0xff]
        %v244 = vld [vmem:[%s177 + $0x8] sm:$0xff]
        %v245 = vld [vmem:[%s177 + $0x10] sm:$0xff]
        %v246 = vld [vmem:[%s177 + $0x18] sm:$0xff]
        %v247 = vld [vmem:[%s177 + $0x20] sm:$0xff]
        %v248 = vld [vmem:[%s177 + $0x28] sm:$0xff]
        %v249 = vld [vmem:[%s177 + $0x30] sm:$0xff]
        %v250 = vld [vmem:[%s177 + $0x38] sm:$0xff]
        %v251 = vld [vmem:[%s177 + $0x40] sm:$0xff]
        %v252 = vld [vmem:[%s177 + $0x48] sm:$0xff]
        %v253 = vld [vmem:[%s177 + $0x50] sm:$0xff]
        %v254 = vld [vmem:[%s177 + $0x58] sm:$0xff]
        %v255 = vld [vmem:[%s177 + $0x60] sm:$0xff]
        %v256 = vld [vmem:[%s177 + $0x68] sm:$0xff]
        %v257 = vld [vmem:[%s177 + $0x70] sm:$0xff]
        %v258 = vld [vmem:[%s177 + $0x78] sm:$0xff]
        %v259 = vld [vmem:[#allocation6] sm:$0xff]
        %v260 = vld [vmem:[#allocation6 + $0x8] sm:$0xff]
        %v261 = vld [vmem:[#allocation6 + $0x10] sm:$0xff]
        %v262 = vld [vmem:[#allocation6 + $0x18] sm:$0xff]
        %v263 = vld [vmem:[#allocation6 + $0x20] sm:$0xff]
        %v264 = vld [vmem:[#allocation6 + $0x28] sm:$0xff]
        %v265 = vld [vmem:[#allocation6 + $0x30] sm:$0xff]
        %v266 = vld [vmem:[#allocation6 + $0x38] sm:$0xff]
        %v267 = vld [vmem:[#allocation6 + $0x40] sm:$0xff]
        %v268 = vld [vmem:[#allocation6 + $0x48] sm:$0xff]
        %v269 = vld [vmem:[#allocation6 + $0x50] sm:$0xff]
        %v270 = vld [vmem:[#allocation6 + $0x58] sm:$0xff]
        %v271 = vld [vmem:[#allocation6 + $0x60] sm:$0xff]
        %v272 = vld [vmem:[#allocation6 + $0x68] sm:$0xff]
        %v273 = vld [vmem:[#allocation6 + $0x70] sm:$0xff]
        %v274 = vld [vmem:[#allocation6 + $0x78] sm:$0xff]
        %275 = vmatpush.msra.mxu0 %v274
        %276 = vmatpush.msra.mxu0 %v273
        %277 = vmatpush.msra.mxu0 %v272
        %278 = vmatpush.msra.mxu0 %v271
        %279 = vmatpush.msra.mxu0 %v270
        %280 = vmatpush.msra.mxu0 %v269
        %281 = vmatpush.msra.mxu0 %v268
        %282 = vmatpush.msra.mxu0 %v267
        %283 = vmatpush.msra.mxu0 %v266
        %284 = vmatpush.msra.mxu0 %v265
        %285 = vmatpush.msra.mxu0 %v264
        %286 = vmatpush.msra.mxu0 %v263
        %287 = vmatpush.msra.mxu0 %v262
        %288 = vmatpush.msra.mxu0 %v261
        %289 = vmatpush.msra.mxu0 %v260
        %290 = vmatpush.msra.mxu0 %v259
        %291 = vmatmul.f32.gmra.mxu0 %v243
        %v292 = vpop.f32.mrf.mxu0
        %v293 = vadd.f32 0.0, %v292
        %294 = vmatmul.f32.gmra.mxu0 %v244
        %v295 = vpop.f32.mrf.mxu0
        %v296 = vadd.f32 0.0, %v295
        %297 = vmatmul.f32.gmra.mxu0 %v245
        %v298 = vpop.f32.mrf.mxu0
        %v299 = vadd.f32 0.0, %v298
        %300 = vmatmul.f32.gmra.mxu0 %v246
        %v301 = vpop.f32.mrf.mxu0
        %v302 = vadd.f32 0.0, %v301
        %303 = vmatmul.f32.gmra.mxu0 %v247
        %v304 = vpop.f32.mrf.mxu0
        %v305 = vadd.f32 0.0, %v304
        %306 = vmatmul.f32.gmra.mxu0 %v248
        %v307 = vpop.f32.mrf.mxu0
        %v308 = vadd.f32 0.0, %v307
        %309 = vmatmul.f32.gmra.mxu0 %v249
        %v310 = vpop.f32.mrf.mxu0
        %v311 = vadd.f32 0.0, %v310
        %312 = vmatmul.f32.gmra.mxu0 %v250
        %v313 = vpop.f32.mrf.mxu0
        %v314 = vadd.f32 0.0, %v313
        %315 = vmatmul.f32.gmra.mxu0 %v251
        %v316 = vpop.f32.mrf.mxu0
        %v317 = vadd.f32 0.0, %v316
        %318 = vmatmul.f32.gmra.mxu0 %v252
        %v319 = vpop.f32.mrf.mxu0
        %v320 = vadd.f32 0.0, %v319
        %321 = vmatmul.f32.gmra.mxu0 %v253
        %v322 = vpop.f32.mrf.mxu0
        %v323 = vadd.f32 0.0, %v322
        %324 = vmatmul.f32.gmra.mxu0 %v254
        %v325 = vpop.f32.mrf.mxu0
        %v326 = vadd.f32 0.0, %v325
        %327 = vmatmul.f32.gmra.mxu0 %v255
        %v328 = vpop.f32.mrf.mxu0
        %v329 = vadd.f32 0.0, %v328
        %330 = vmatmul.f32.gmra.mxu0 %v256
        %v331 = vpop.f32.mrf.mxu0
        %v332 = vadd.f32 0.0, %v331
        %333 = vmatmul.f32.gmra.mxu0 %v257
        %v334 = vpop.f32.mrf.mxu0
        %v335 = vadd.f32 0.0, %v334
        %336 = vmatmul.f32.gmra.mxu0 %v258
        %v337 = vpop.f32.mrf.mxu0
        %v338 = vadd.f32 0.0, %v337
        %339 = vdwg.mxu0
        %v340 = vadd.f32 %v227, %v293
        %v341 = vadd.f32 %v228, %v296
        %v342 = vadd.f32 %v229, %v299
        %v343 = vadd.f32 %v230, %v302
        %v344 = vadd.f32 %v231, %v305
        %v345 = vadd.f32 %v232, %v308
        %v346 = vadd.f32 %v233, %v311
        %v347 = vadd.f32 %v234, %v314
        %v348 = vadd.f32 %v235, %v317
        %v349 = vadd.f32 %v236, %v320
        %v350 = vadd.f32 %v237, %v323
        %v351 = vadd.f32 %v238, %v326
        %v352 = vadd.f32 %v239, %v329
        %v353 = vadd.f32 %v240, %v332
        %v354 = vadd.f32 %v241, %v335
        %v355 = vadd.f32 %v242, %v338
        %356 = vst [vmem:[#allocation2] sm:$0xff] %v340
        %357 = vst [vmem:[#allocation2 + $0x8] sm:$0xff] %v341
        %358 = vst [vmem:[#allocation2 + $0x10] sm:$0xff] %v342
        %359 = vst [vmem:[#allocation2 + $0x18] sm:$0xff] %v343
        %360 = vst [vmem:[#allocation2 + $0x20] sm:$0xff] %v344
        %361 = vst [vmem:[#allocation2 + $0x28] sm:$0xff] %v345
        %362 = vst [vmem:[#allocation2 + $0x30] sm:$0xff] %v346
        %363 = vst [vmem:[#allocation2 + $0x38] sm:$0xff] %v347
        %364 = vst [vmem:[#allocation2 + $0x40] sm:$0xff] %v348
        %365 = vst [vmem:[#allocation2 + $0x48] sm:$0xff] %v349
        %366 = vst [vmem:[#allocation2 + $0x50] sm:$0xff] %v350
        %367 = vst [vmem:[#allocation2 + $0x58] sm:$0xff] %v351
        %368 = vst [vmem:[#allocation2 + $0x60] sm:$0xff] %v352
        %369 = vst [vmem:[#allocation2 + $0x68] sm:$0xff] %v353
        %370 = vst [vmem:[#allocation2 + $0x70] sm:$0xff] %v354
        %371 = vst [vmem:[#allocation2 + $0x78] sm:$0xff] %v355
        // Predicated region
        $region41: #{tpu_custom_call.1} parent=27 // pred_check
          %p372 = pneg %p207
        $region42: #{tpu_custom_call.1} parent=27 // pred_check_branch
          %374 = sbr.rel (%p372) target = $region44
        $region43: #{tpu_custom_call.1} parent=27 // pred_region
          %v375 = vld [vmem:[#allocation2] sm:$0xff]
          %v376 = vld [vmem:[#allocation2 + $0x8] sm:$0xff]
          %v377 = vld [vmem:[#allocation2 + $0x10] sm:$0xff]
          %v378 = vld [vmem:[#allocation2 + $0x18] sm:$0xff]
          %v379 = vld [vmem:[#allocation2 + $0x20] sm:$0xff]
          %v380 = vld [vmem:[#allocation2 + $0x28] sm:$0xff]
          %v381 = vld [vmem:[#allocation2 + $0x30] sm:$0xff]
          %v382 = vld [vmem:[#allocation2 + $0x38] sm:$0xff]
          %v383 = vld [vmem:[#allocation2 + $0x40] sm:$0xff]
          %v384 = vld [vmem:[#allocation2 + $0x48] sm:$0xff]
          %v385 = vld [vmem:[#allocation2 + $0x50] sm:$0xff]
          %v386 = vld [vmem:[#allocation2 + $0x58] sm:$0xff]
          %v387 = vld [vmem:[#allocation2 + $0x60] sm:$0xff]
          %v388 = vld [vmem:[#allocation2 + $0x68] sm:$0xff]
          %v389 = vld [vmem:[#allocation2 + $0x70] sm:$0xff]
          %v390 = vld [vmem:[#allocation2 + $0x78] sm:$0xff]
          %v391 = vpack.c.bf16 %v375, %v375
          %v392 = vpack.c.bf16 %v376, %v376
          %v393 = vpack.c.bf16 %v377, %v377
          %v394 = vpack.c.bf16 %v378, %v378
          %v395 = vpack.c.bf16 %v379, %v379
          %v396 = vpack.c.bf16 %v380, %v380
          %v397 = vpack.c.bf16 %v381, %v381
          %v398 = vpack.c.bf16 %v382, %v382
          %v399 = vpack.c.bf16 %v383, %v383
          %v400 = vpack.c.bf16 %v384, %v384
          %v401 = vpack.c.bf16 %v385, %v385
          %v402 = vpack.c.bf16 %v386, %v386
          %v403 = vpack.c.bf16 %v387, %v387
          %v404 = vpack.c.bf16 %v388, %v388
          %v405 = vpack.c.bf16 %v389, %v389
          %v406 = vpack.c.bf16 %v390, %v390
          %407 = vst [vmem:[%s203] sm:$0xf] %v391
          %408 = vst [vmem:[%s203 + $0x4] sm:$0xf] %v392
          %409 = vst [vmem:[%s203 + $0x8] sm:$0xf] %v393
          %410 = vst [vmem:[%s203 + $0xc] sm:$0xf] %v394
          %411 = vst [vmem:[%s203 + $0x10] sm:$0xf] %v395
          %412 = vst [vmem:[%s203 + $0x14] sm:$0xf] %v396
          %413 = vst [vmem:[%s203 + $0x18] sm:$0xf] %v397
          %414 = vst [vmem:[%s203 + $0x1c] sm:$0xf] %v398
          %415 = vst [vmem:[%s203 + $0x20] sm:$0xf] %v399
          %416 = vst [vmem:[%s203 + $0x24] sm:$0xf] %v400
          %417 = vst [vmem:[%s203 + $0x28] sm:$0xf] %v401
          %418 = vst [vmem:[%s203 + $0x2c] sm:$0xf] %v402
          %419 = vst [vmem:[%s203 + $0x30] sm:$0xf] %v403
          %420 = vst [vmem:[%s203 + $0x34] sm:$0xf] %v404
          %421 = vst [vmem:[%s203 + $0x38] sm:$0xf] %v405
          %422 = vst [vmem:[%s203 + $0x3c] sm:$0xf] %v406
        $region44: #{tpu_custom_call.1} parent=27 // pred_fallthru
          _
        %s423 = sand.u32 %s94, 1
        %s424 = scalar_lea.sflag [#allocation5], %s423
        %s425 = sand.u32 %s94, 1
        %s426 = smul.addr %s425, 64
        %s427 = scalar_lea.vmem [#allocation8], %s426
        // Predicated region
        $region45: #{tpu_custom_call.1} parent=27 // pred_check
          %p428 = pneg %p104
        $region46: #{tpu_custom_call.1} parent=27 // pred_check_branch
          %430 = sbr.rel (%p428) target = $region48
        $region47: #{tpu_custom_call.1} parent=27 // pred_region
          %s431 = smul.u32 16, %s24
          %433 = vsyncadd %s424, 0
          %s434 = smul.addr %s431, 4
          %s435 = scalar_lea.hbm %s2, %s434
          %s436 = sshll.u32 %s427, 4
          %s437 = int_to_ptr.vmem [resolvable:$true] %s436
          %s438 = sshll.u32 %s435, 4
          %s439 = int_to_ptr.hbm [resolvable:$true] %s438
          %444 = dma.vmem_to_hbm [thread:$0]  %s437, 1024, %s439, %s424, 64, 64, 4
        $region48: #{tpu_custom_call.1} parent=27 // pred_fallthru
          _
      $region28: #{tpu_custom_call.1} parent=5 // pred_fallthru
        _
      %p445 = scmp.le.s32.totalorder 2, %s15
      // Predicated region
      $region49: #{tpu_custom_call.1} parent=5 // pred_check
        %p446 = pneg %p445
      $region50: #{tpu_custom_call.1} parent=5 // pred_check_branch
        %448 = sbr.rel (%p446) target = $region52
      $region51: #{tpu_custom_call.1} parent=5 // pred_region
        %s449 = ssub.s32 %s15, 2
        // Predicated region
        $region53: #{tpu_custom_call.1} parent=51 // pred_check
          %p450 = pneg %p110
        $region54: #{tpu_custom_call.1} parent=51 // pred_check_branch
          %452 = sbr.rel (%p450) target = $region56
        $region55: #{tpu_custom_call.1} parent=51 // pred_region
          %s453 = sand.u32 %s95, 1
          %s454 = scalar_lea.sflag [#allocation5], %s453
          %s455 = sand.u32 %s95, 1
          %s456 = smul.addr %s455, 64
          %s457 = scalar_lea.vmem [#allocation8], %s456
          %459 = dma.done %s454, 1024
        $region56: #{tpu_custom_call.1} parent=51 // pred_fallthru
          _
      $region52: #{tpu_custom_call.1} parent=5 // pred_fallthru
        _
    $region6: #{tpu_custom_call.1} parent=1 // loop_footer
      %s19 = sadd.s32 1, %s15
    $region7: #{tpu_custom_call.1} parent=1 // loop_footer_branch
      %14 = sbr.rel target = $region3
    $region8: #{tpu_custom_call.1} parent=1 // loop_exit
      _
    %460 = vsyncpa [#allocation4], 1
    %s461 = scalar_lea.sflag [#allocation4], 1
    %462 = vsyncpa %s461, 1
    %463 = vsyncpa [#allocation7], 1
    %464 = vsyncpa [#allocation5], 1
    %s465 = scalar_lea.sflag [#allocation5], 1
    %466 = vsyncpa %s465, 1

</llo_original>
